<compile_context>
chip_gen: v6e
topology: v6e:2x2x1
jax: 0.10.0
libtpu: 0.0.40
codegen_flags: <defaults>
</compile_context>

<pallas_src>
import jax
import jax.numpy as jnp
from jax import lax
from jax.experimental import pallas as pl
from jax.experimental.pallas import tpu as pltpu

EPS = 1e-5


# ------------------------------ fused kernel ----------------------------------
def _adain_fused_kernel(h_ref, patch_ref, w_ref, b_ref, o_ref):
    n = pl.program_id(0)

    # ---- BatchNorm2d (affine=False), train mode: stats over (N, H, W) ----
    h_all = h_ref[...].astype(jnp.float32)            # (N, Ch, HW)  ch=sublane, HW=lane
    N, Ch, HW = h_all.shape
    cnt = jnp.float32(N * HW)

    s = jnp.sum(h_all, axis=0)                        # (Ch, HW)  plain vreg adds (VPU)
    sq = jnp.sum(h_all * h_all, axis=0)               # (Ch, HW)
    mean = jnp.sum(s, axis=1, keepdims=True) / cnt    # (Ch, 1)   lane reduce (XLU)
    var = jnp.sum(sq, axis=1, keepdims=True) / cnt - mean * mean
    var = jnp.maximum(var, 0.0)                       # guard E[x^2]-E[x]^2 cancellation
    inv = lax.rsqrt(var + jnp.float32(EPS))           # EUP

    # ---- gamma/beta heads: one matmul for both 3x3 convs ----
    patches = patch_ref[0].astype(jnp.float32)        # (9*Ci, HW) im2col (wrapper-built)
    gb = jnp.dot(w_ref[...], patches,
                 preferred_element_type=jnp.float32)  # (2*Ch, HW) single MXU push
    gb = gb + b_ref[...]                              # (2*Ch, 1) broadcast bias
    gamma = gb[:Ch]                                   # (Ch, HW) sublane-aligned slice
    beta = gb[Ch:]                                    # (Ch, HW)

    # ---- normalize + modulate this batch element ----
    hn = (h_ref[n].astype(jnp.float32) - mean) * inv  # (Ch, HW)
    o_ref[0] = (gamma * hn + beta).astype(o_ref.dtype)


def adain_fused(h_ncl, patches, w_cat, b_cat):
    N, Ch, HW = h_ncl.shape
    K = patches.shape[1]                              # 9 * Ci
    return pl.pallas_call(
        _adain_fused_kernel,
        out_shape=jax.ShapeDtypeStruct((N, Ch, HW), h_ncl.dtype),
        grid=(N,),
        in_specs=[
            pl.BlockSpec((N, Ch, HW), lambda n: (0, 0, 0)),   # full h (batch stats)
            pl.BlockSpec((1, K, HW), lambda n: (n, 0, 0)),    # per-sample im2col
            pl.BlockSpec((2 * Ch, K), lambda n: (0, 0)),      # concat conv weights
            pl.BlockSpec((2 * Ch, 1), lambda n: (0, 0)),      # concat conv biases
        ],
        out_specs=pl.BlockSpec((1, Ch, HW), lambda n: (n, 0, 0)),
        compiler_params=pltpu.CompilerParams(dimension_semantics=("parallel",)),
    )(h_ncl, patches, w_cat, b_cat)


# ------------------------------ wrapper (glue) ---------------------------------
def _nearest_resize_nchw(x, out_h, out_w):
    # matches F.interpolate(mode='nearest'): idx = floor(out_idx * in / out)
    N, C, H, W = x.shape
    iy = (jnp.arange(out_h) * H) // out_h
    ix = (jnp.arange(out_w) * W) // out_w
    return x[:, :, iy[:, None], ix[None, :]]


def _im2col_3x3(x_nchw):
    """(N, Ci, H, W) -> (N, 9*Ci, H*W), tap-major then channel, zero pad=1."""
    N, Ci, H, W = x_nchw.shape
    xp = jnp.pad(x_nchw, ((0, 0), (0, 0), (1, 1), (1, 1)))
    taps = [xp[:, :, dy:dy + H, dx:dx + W].reshape(N, Ci, H * W)
            for dy in range(3) for dx in range(3)]
    return jnp.concatenate(taps, axis=1)


def _conv_w_to_mat(w_oihw):
    """PyTorch Conv2d weight (O, I, 3, 3) -> (O, 9*I), matching _im2col_3x3 order."""
    O, I, kh, kw = w_oihw.shape
    return jnp.transpose(w_oihw, (0, 2, 3, 1)).reshape(O, kh * kw * I)


def adain_forward(h_in_nchw, x_nchw, params):
    """AdaIN forward. h_in: (N, Ch, H, W), x: (N, Ci, H', W'), both NCHW f32."""
    N, Ch, H, W = h_in_nchw.shape
    if x_nchw.ndim == 4 and x_nchw.shape[2:] != (H, W):
        x_nchw = _nearest_resize_nchw(x_nchw, H, W)
    HW = H * W

    h_ncl = h_in_nchw.reshape(N, Ch, HW).astype(jnp.float32)      # no transpose needed
    patches = _im2col_3x3(x_nchw.astype(jnp.float32))             # (N, 9*Ci, HW)

    w_cat = jnp.concatenate([_conv_w_to_mat(params["w_gamma"]),
                             _conv_w_to_mat(params["w_beta"])],
                            axis=0).astype(jnp.float32)           # (2*Ch, 9*Ci)
    b_cat = jnp.concatenate([params["b_gamma"],
                             params["b_beta"]]).reshape(2 * Ch, 1).astype(jnp.float32)

    out = adain_fused(h_ncl, patches, w_cat, b_cat)
    return out.reshape(N, Ch, H, W)


# ----------------------------- pure-JAX reference -------------------------------
def adain_reference(h_in_nchw, x_nchw, params):
    N, Ch, H, W = h_in_nchw.shape
    if x_nchw.ndim == 4 and x_nchw.shape[2:] != (H, W):
        x_nchw = _nearest_resize_nchw(x_nchw, H, W)
    mean = jnp.mean(h_in_nchw, axis=(0, 2, 3), keepdims=True)
    var = jnp.mean((h_in_nchw - mean) ** 2, axis=(0, 2, 3), keepdims=True)
    h_act = (h_in_nchw - mean) / jnp.sqrt(var + EPS)

    def conv(w_oihw, b):
        y = lax.conv_general_dilated(x_nchw, w_oihw, (1, 1), "SAME",
                                     dimension_numbers=("NCHW", "OIHW", "NCHW"))
        return y + b.reshape(1, -1, 1, 1)

    gamma = conv(params["w_gamma"], params["b_gamma"])
    beta = conv(params["w_beta"], params["b_beta"])
    return gamma * h_act + beta


# ----------------------------------- main ---------------------------------------
if __name__ == "__main__":
    key = jax.random.PRNGKey(0)
    k1, k2, k3, k4, k5, k6 = jax.random.split(key, 6)

    N, Ch, Ci, H, W = 2, 8, 4, 16, 16

    h_in = jax.random.normal(k1, (N, Ch, H, W), jnp.float32)
    x = jax.random.normal(k2, (N, Ci, H, W), jnp.float32)

    # deterministic parameter init (Conv2d(Ci, Ch, 3, padding=1) x2, with bias),
    # PyTorch OIHW weight layout.
    params = {
        "w_gamma": jax.random.normal(k3, (Ch, Ci, 3, 3), jnp.float32) * 0.1,
        "b_gamma": jax.random.normal(k4, (Ch,), jnp.float32) * 0.1,
        "w_beta": jax.random.normal(k5, (Ch, Ci, 3, 3), jnp.float32) * 0.1,
        "b_beta": jax.random.normal(k6, (Ch,), jnp.float32) * 0.1,
    }

    out = adain_forward(h_in, x, params)
    out = jax.block_until_ready(out)

    ref = jax.block_until_ready(adain_reference(h_in, x, params))
    assert out.shape == (N, Ch, H, W), out.shape
    assert jnp.allclose(out, ref, atol=1e-4, rtol=1e-4), float(jnp.max(jnp.abs(out - ref)))

    print("KERNEL_OK")
</pallas_src>

<mosaic_0001>
module attributes {stable_mosaic.version = 11 : i64} {
  func.func @_adain_fused_kernel(%arg0: i32, %arg1: memref<2x8x256xf32, #tpu.memory_space<vmem>>, %arg2: memref<1x36x256xf32, #tpu.memory_space<vmem>>, %arg3: memref<16x36xf32, #tpu.memory_space<vmem>>, %arg4: memref<16x1xf32, #tpu.memory_space<vmem>>, %arg5: memref<1x8x256xf32, #tpu.memory_space<vmem>>) attributes {dimension_semantics = [#tpu.dimension_semantics<parallel>], iteration_bounds = array<i64: 2>, scalar_prefetch = 0 : i64, scratch_operands = 0 : i64, tpu.core_type = #tpu.core_type<tc>, window_params = [{pipeline_mode = #tpu.pipeline_mode<synchronous>, transform_indices = @transform_0, window_bounds = array<i64: 2, 8, 256>}, {transform_indices = @transform_1, window_bounds = array<i64: 1, 36, 256>}, {pipeline_mode = #tpu.pipeline_mode<synchronous>, transform_indices = @transform_2, window_bounds = array<i64: 16, 36>}, {pipeline_mode = #tpu.pipeline_mode<synchronous>, transform_indices = @transform_3, window_bounds = array<i64: 16, 1>}, {transform_indices = @transform_4, window_bounds = array<i64: 1, 8, 256>}]} {
    %c0 = arith.constant 0 : index
    %c0_0 = arith.constant 0 : index
    %c0_1 = arith.constant 0 : index
    %0 = vector.load %arg1[%c0, %c0_0, %c0_1] : memref<2x8x256xf32, #tpu.memory_space<vmem>>, vector<2x8x256xf32>
    %cst = arith.constant dense<0.000000e+00> : vector<8x256xf32>
    %1 = vector.multi_reduction <add>, %0, %cst [0] : vector<2x8x256xf32> to vector<8x256xf32>
    %2 = arith.mulf %0, %0 : vector<2x8x256xf32>
    %cst_2 = arith.constant dense<0.000000e+00> : vector<8x256xf32>
    %3 = vector.multi_reduction <add>, %2, %cst_2 [0] : vector<2x8x256xf32> to vector<8x256xf32>
    %cst_3 = arith.constant dense<0.000000e+00> : vector<8xf32>
    %4 = vector.multi_reduction <add>, %1, %cst_3 [1] : vector<8x256xf32> to vector<8xf32>
    %5 = vector.shape_cast %4 : vector<8xf32> to vector<8x1xf32>
    %cst_4 = arith.constant 5.120000e+02 : f32
    %6 = vector.broadcast %cst_4 : f32 to vector<8x1xf32>
    %7 = arith.divf %5, %6 : vector<8x1xf32>
    %cst_5 = arith.constant dense<0.000000e+00> : vector<8xf32>
    %8 = vector.multi_reduction <add>, %3, %cst_5 [1] : vector<8x256xf32> to vector<8xf32>
    %9 = vector.shape_cast %8 : vector<8xf32> to vector<8x1xf32>
    %cst_6 = arith.constant 5.120000e+02 : f32
    %10 = vector.broadcast %cst_6 : f32 to vector<8x1xf32>
    %11 = arith.divf %9, %10 : vector<8x1xf32>
    %12 = arith.mulf %7, %7 : vector<8x1xf32>
    %13 = arith.subf %11, %12 : vector<8x1xf32>
    %cst_7 = arith.constant 0.000000e+00 : f32
    %14 = vector.broadcast %cst_7 : f32 to vector<8x1xf32>
    %15 = arith.maximumf %13, %14 : vector<8x1xf32>
    %cst_8 = arith.constant 9.99999974E-6 : f32
    %16 = vector.broadcast %cst_8 : f32 to vector<8x1xf32>
    %17 = arith.addf %15, %16 : vector<8x1xf32>
    %18 = math.rsqrt %17 : vector<8x1xf32>
    %c0_9 = arith.constant 0 : index
    %c0_10 = arith.constant 0 : index
    %c0_11 = arith.constant 0 : index
    %19 = vector.load %arg2[%c0_9, %c0_10, %c0_11] : memref<1x36x256xf32, #tpu.memory_space<vmem>>, vector<1x36x256xf32>
    %20 = vector.shape_cast %19 : vector<1x36x256xf32> to vector<36x256xf32>
    %c0_12 = arith.constant 0 : index
    %c0_13 = arith.constant 0 : index
    %21 = vector.load %arg3[%c0_12, %c0_13] : memref<16x36xf32, #tpu.memory_space<vmem>>, vector<16x36xf32>
    %cst_14 = arith.constant dense<0.000000e+00> : vector<16x256xf32>
    %22 = tpu.matmul %21, %20, %cst_14 {dimension_numbers = #tpu.dot_dimension_numbers<[1], [0], [0], [1], [0, 0, 1, 1], [], []>} : vector<16x36xf32>, vector<36x256xf32>, vector<16x256xf32> -> vector<16x256xf32>
    %c0_15 = arith.constant 0 : index
    %c0_16 = arith.constant 0 : index
    %23 = vector.load %arg4[%c0_15, %c0_16] : memref<16x1xf32, #tpu.memory_space<vmem>>, vector<16x1xf32>
    %24 = vector.broadcast %23 : vector<16x1xf32> to vector<16x256xf32>
    %25 = arith.addf %22, %24 : vector<16x256xf32>
    %26 = vector.extract_strided_slice %25 {offsets = [0, 0], sizes = [8, 256], strides = [1, 1]} : vector<16x256xf32> to vector<8x256xf32>
    %27 = vector.extract_strided_slice %25 {offsets = [8, 0], sizes = [8, 256], strides = [1, 1]} : vector<16x256xf32> to vector<8x256xf32>
    %28 = arith.index_cast %arg0 : i32 to index
    %c0_17 = arith.constant 0 : index
    %c0_18 = arith.constant 0 : index
    %29 = vector.load %arg1[%28, %c0_17, %c0_18] : memref<2x8x256xf32, #tpu.memory_space<vmem>>, vector<1x8x256xf32>
    %30 = vector.shape_cast %29 : vector<1x8x256xf32> to vector<8x256xf32>
    %31 = vector.broadcast %7 : vector<8x1xf32> to vector<8x256xf32>
    %32 = arith.subf %30, %31 : vector<8x256xf32>
    %33 = vector.broadcast %18 : vector<8x1xf32> to vector<8x256xf32>
    %34 = arith.mulf %32, %33 : vector<8x256xf32>
    %35 = arith.mulf %26, %34 : vector<8x256xf32>
    %36 = arith.addf %35, %27 : vector<8x256xf32>
    %c0_19 = arith.constant 0 : index
    %c0_20 = arith.constant 0 : index
    %c0_21 = arith.constant 0 : index
    %37 = vector.load %arg5[%c0_19, %c0_20, %c0_21] : memref<1x8x256xf32, #tpu.memory_space<vmem>>, vector<1x8x256xf32>
    %38 = vector.shape_cast %37 : vector<1x8x256xf32> to vector<8x256xf32>
    %39 = vector.shape_cast %36 : vector<8x256xf32> to vector<1x8x256xf32>
    tpu.vector_store %arg5[%c0_19, %c0_20, %c0_21], %39 {strides = array<i32>} : memref<1x8x256xf32, #tpu.memory_space<vmem>>, vector<1x8x256xf32>,
    return
  }
  func.func @transform_0(%arg0: i32) -> (i32, i32, i32) {
    %c0_i32 = arith.constant 0 : i32
    %c0_i32_0 = arith.constant 0 : i32
    %c0_i32_1 = arith.constant 0 : i32
    %c0_i32_2 = arith.constant 0 : i32
    return %c0_i32, %c0_i32_0, %c0_i32_1 : i32, i32, i32
  }
  func.func @transform_1(%arg0: i32) -> (i32, i32, i32) {
    %c0_i32 = arith.constant 0 : i32
    %c0_i32_0 = arith.constant 0 : i32
    %c0_i32_1 = arith.constant 0 : i32
    return %arg0, %c0_i32, %c0_i32_0 : i32, i32, i32
  }
  func.func @transform_2(%arg0: i32) -> (i32, i32) {
    %c0_i32 = arith.constant 0 : i32
    %c0_i32_0 = arith.constant 0 : i32
    %c0_i32_1 = arith.constant 0 : i32
    return %c0_i32, %c0_i32_0 : i32, i32
  }
  func.func @transform_3(%arg0: i32) -> (i32, i32) {
    %c0_i32 = arith.constant 0 : i32
    %c0_i32_0 = arith.constant 0 : i32
    %c0_i32_1 = arith.constant 0 : i32
    return %c0_i32, %c0_i32_0 : i32, i32
  }
  func.func @transform_4(%arg0: i32) -> (i32, i32, i32) {
    %c0_i32 = arith.constant 0 : i32
    %c0_i32_0 = arith.constant 0 : i32
    %c0_i32_1 = arith.constant 0 : i32
    return %arg0, %c0_i32, %c0_i32_0 : i32, i32, i32
  }
}

</mosaic_0001>

<llo_original>
// kernel: tpu_custom_call.1
$region0: #{tpu_custom_call.1}
  #allocation0 [shape = 'u32[]', space=smem, size = 0x4, offset = 0x4, fixed_abs, tag = 'smem constant byte address 0x4 - core index']
  #allocation1 [shape = 'u32[144,128]{1,0:T(1,128)}', space=vmem, size = 0x12000, scoped, tag = 'internal scratch']
  %s0 = inlined_call_operand.vmem [shape: f32[2,8,256], index: 0, kind: input, shape index: {}]
  %s1 = inlined_call_operand.vmem [shape: f32[2,36,256], index: 1, kind: input, shape index: {}]
  %s2 = inlined_call_operand.vmem [shape: f32[16,36], index: 2, kind: input, shape index: {}]
  %s3 = inlined_call_operand.vmem [shape: f32[16,1], index: 3, kind: input, shape index: {}]
  %s4 = inlined_call_operand.hbm [shape: f32[2,8,256], index: 4, kind: output, shape index: {}]
  %s5 = sld [smem:[#allocation0]]
  $region49: #{tpu_custom_call.1} parent=0
    _
  %s7 = ssub.s32 1, %s5
  %s8 = scalar_select 0, %s7, %s5
  $region1: #{tpu_custom_call.1} parent=0
    #allocation2 [shape = 'u8[16384]{0}', space=vmem, size = 0x4000, scoped, tag = 'output window, operand 0']
    #allocation3 [shape = 's32[2]{0}', space=sflag, size = 0x8, scoped, tag = 'scoped memory for tpu_custom_call.1']
    %9 = vsyncpa [#allocation3], 0
    %s10 = scalar_lea.sflag [#allocation3], 1
    %11 = vsyncpa %s10, 0
    loop: start=0, step=1, limit=4
    $region2: #{tpu_custom_call.1} parent=1 // loop_pre_header
      _
    $region3: #{tpu_custom_call.1} parent=1 // loop_header
      %s13 = sphi 0, %s17
      %p14 = scmp.ge.s32.totalorder %s13, 4
      %s21 = sphi 0, %s21
      %s23 = sphi 0, %s21
      %s24 = sphi 0, %s23
      %s38 = sphi 0, %s24
      %s44 = sphi 0, %s46
      %s47 = sphi 0, %s44
      %s48 = sphi 0, %s47
      %s64 = sphi 0, %s48
      %s68 = sphi 0, %s68
      %s70 = sphi 0, %s68
      %s71 = sphi 0, %s70
      %s85 = sphi 0, %s71
      %s89 = sphi 0, %s89
      %s91 = sphi 0, %s89
      %s92 = sphi 0, %s91
      %s106 = sphi 0, %s92
      %s112 = sphi 0, %s114
      %s115 = sphi 0, %s112
      %s116 = sphi 0, %s115
      %s132 = sphi 0, %s116
    $region4: #{tpu_custom_call.1} parent=1 // loop_header_branch
      %16 = sbr.rel (%p14) target = $region8
    $region5: #{tpu_custom_call.1} parent=1 // loop_body
      %s18 = ssub.s32 %s13, 1
      %s19 = ssub.s32 %s13, 2
      %s20 = sadd.s32 %s13, 1
      %s22 = sadd.s32 %s21, 1
      %p25 = scmp.eq.s32.totalorder %s13, 1
      %p26 = scmp.ne.s32.totalorder %s21, %s23
      %p27 = scmp.eq.s32.totalorder %s13, 0
      %p28 = por %p26, %p27
      %p29 = scmp.ne.s32.totalorder %s21, %s23
      %p30 = scmp.eq.s32.totalorder %s18, 1
      %p31 = por %p29, %p30
      %p32 = scmp.ne.s32.totalorder %s23, %s24
      %p33 = scmp.eq.s32.totalorder %s18, 0
      %p34 = por %p32, %p33
      %p35 = scmp.ne.s32.totalorder %s23, %s24
      %p36 = scmp.eq.s32.totalorder %s19, 1
      %p37 = por %p35, %p36
      %p39 = scmp.ne.s32.totalorder %s24, %s38
      %p40 = scmp.eq.s32.totalorder %s19, 0
      %p41 = por %p39, %p40
      %s42 = ssub.s32 %s13, %s20
      %p43 = scmp.eq.s32.totalorder %s42, 0
      %s45 = sadd.s32 %s44, 1
      %s46 = scalar_select %p43, %s44, %s45
      %p49 = pneg %p43
      %p50 = scmp.eq.s32.totalorder %s13, 1
      %p51 = por %p49, %p50
      %p52 = scmp.ne.s32.totalorder %s44, %s47
      %p53 = scmp.eq.s32.totalorder %s13, 0
      %p54 = por %p52, %p53
      %p55 = scmp.ne.s32.totalorder %s44, %s47
      %p56 = scmp.eq.s32.totalorder %s18, 1
      %p57 = por %p55, %p56
      %p58 = scmp.ne.s32.totalorder %s47, %s48
      %p59 = scmp.eq.s32.totalorder %s18, 0
      %p60 = por %p58, %p59
      %p61 = scmp.ne.s32.totalorder %s47, %s48
      %p62 = scmp.eq.s32.totalorder %s19, 1
      %p63 = por %p61, %p62
      %p65 = scmp.ne.s32.totalorder %s48, %s64
      %p66 = scmp.eq.s32.totalorder %s19, 0
      %p67 = por %p65, %p66
      %s69 = sadd.s32 %s68, 1
      %p72 = scmp.eq.s32.totalorder %s13, 1
      %p73 = scmp.ne.s32.totalorder %s68, %s70
      %p74 = scmp.eq.s32.totalorder %s13, 0
      %p75 = por %p73, %p74
      %p76 = scmp.ne.s32.totalorder %s68, %s70
      %p77 = scmp.eq.s32.totalorder %s18, 1
      %p78 = por %p76, %p77
      %p79 = scmp.ne.s32.totalorder %s70, %s71
      %p80 = scmp.eq.s32.totalorder %s18, 0
      %p81 = por %p79, %p80
      %p82 = scmp.ne.s32.totalorder %s70, %s71
      %p83 = scmp.eq.s32.totalorder %s19, 1
      %p84 = por %p82, %p83
      %p86 = scmp.ne.s32.totalorder %s71, %s85
      %p87 = scmp.eq.s32.totalorder %s19, 0
      %p88 = por %p86, %p87
      %s90 = sadd.s32 %s89, 1
      %p93 = scmp.eq.s32.totalorder %s13, 1
      %p94 = scmp.ne.s32.totalorder %s89, %s91
      %p95 = scmp.eq.s32.totalorder %s13, 0
      %p96 = por %p94, %p95
      %p97 = scmp.ne.s32.totalorder %s89, %s91
      %p98 = scmp.eq.s32.totalorder %s18, 1
      %p99 = por %p97, %p98
      %p100 = scmp.ne.s32.totalorder %s91, %s92
      %p101 = scmp.eq.s32.totalorder %s18, 0
      %p102 = por %p100, %p101
      %p103 = scmp.ne.s32.totalorder %s91, %s92
      %p104 = scmp.eq.s32.totalorder %s19, 1
      %p105 = por %p103, %p104
      %p107 = scmp.ne.s32.totalorder %s92, %s106
      %p108 = scmp.eq.s32.totalorder %s19, 0
      %p109 = por %p107, %p108
      %s110 = ssub.s32 %s13, %s20
      %p111 = scmp.eq.s32.totalorder %s110, 0
      %s113 = sadd.s32 %s112, 1
      %s114 = scalar_select %p111, %s112, %s113
      %p117 = pneg %p111
      %p118 = scmp.eq.s32.totalorder %s13, 1
      %p119 = por %p117, %p118
      %p120 = scmp.ne.s32.totalorder %s112, %s115
      %p121 = scmp.eq.s32.totalorder %s13, 0
      %p122 = por %p120, %p121
      %p123 = scmp.ne.s32.totalorder %s112, %s115
      %p124 = scmp.eq.s32.totalorder %s18, 1
      %p125 = por %p123, %p124
      %p126 = scmp.ne.s32.totalorder %s115, %s116
      %p127 = scmp.eq.s32.totalorder %s18, 0
      %p128 = por %p126, %p127
      %p129 = scmp.ne.s32.totalorder %s115, %s116
      %p130 = scmp.eq.s32.totalorder %s19, 1
      %p131 = por %p129, %p130
      %p133 = scmp.ne.s32.totalorder %s116, %s132
      %p134 = scmp.eq.s32.totalorder %s19, 0
      %p135 = por %p133, %p134
      %p136 = scmp.le.s32.totalorder 1, %s13
      %p137 = scmp.lt.s32.totalorder %s13, 3
      %p138 = pnand %p136, %p137
      %p139 = pneg %p138
      // Predicated region
      $region9: #{tpu_custom_call.1} parent=5 // pred_check
        _
      $region10: #{tpu_custom_call.1} parent=5 // pred_check_branch
        %141 = sbr.rel (%p138) target = $region12
      $region11: #{tpu_custom_call.1} parent=5 // pred_region
        %s142 = ssub.s32 %s13, 1
        // Predicated region
        $region13: #{tpu_custom_call.1} parent=11 // pred_check
          %p143 = pneg %p34
        $region14: #{tpu_custom_call.1} parent=11 // pred_check_branch
          %145 = sbr.rel (%p143) target = $region16
        $region15: #{tpu_custom_call.1} parent=11 // pred_region
          _
        $region16: #{tpu_custom_call.1} parent=11 // pred_fallthru
          _
        // Predicated region
        $region17: #{tpu_custom_call.1} parent=11 // pred_check
          %p146 = pneg %p81
        $region18: #{tpu_custom_call.1} parent=11 // pred_check_branch
          %148 = sbr.rel (%p146) target = $region20
        $region19: #{tpu_custom_call.1} parent=11 // pred_region
          _
        $region20: #{tpu_custom_call.1} parent=11 // pred_fallthru
          _
        // Predicated region
        $region21: #{tpu_custom_call.1} parent=11 // pred_check
          %p149 = pneg %p102
        $region22: #{tpu_custom_call.1} parent=11 // pred_check_branch
          %151 = sbr.rel (%p149) target = $region24
        $region23: #{tpu_custom_call.1} parent=11 // pred_region
          _
        $region24: #{tpu_custom_call.1} parent=11 // pred_fallthru
          _
      $region12: #{tpu_custom_call.1} parent=5 // pred_fallthru
        _
      %p152 = scmp.lt.s32.totalorder %s13, 2
      // Predicated region
      $region25: #{tpu_custom_call.1} parent=5 // pred_check
        %p153 = pneg %p152
      $region26: #{tpu_custom_call.1} parent=5 // pred_check_branch
        %155 = sbr.rel (%p153) target = $region28
      $region27: #{tpu_custom_call.1} parent=5 // pred_region
        // Predicated region
        $region29: #{tpu_custom_call.1} parent=27 // pred_check
          %p156 = pneg %p54
        $region30: #{tpu_custom_call.1} parent=27 // pred_check_branch
          %158 = sbr.rel (%p156) target = $region32
        $region31: #{tpu_custom_call.1} parent=27 // pred_region
          %p159 = scmp.lt.s32.totalorder %s13, 1
          %s160 = scalar_select %p159, %s13, 1
          %s161 = smul.addr %s160, 10
          %s162 = smul.addr %s161, 8
          %s163 = scalar_lea.vmem %s1, %s162
        $region32: #{tpu_custom_call.1} parent=27 // pred_fallthru
          _
      $region28: #{tpu_custom_call.1} parent=5 // pred_fallthru
        _
      %p164 = scmp.le.s32.totalorder 1, %s13
      %p165 = scmp.lt.s32.totalorder %s13, 3
      %p166 = pnand %p164, %p165
      %p167 = pneg %p166
      // Predicated region
      $region33: #{tpu_custom_call.1} parent=5 // pred_check
        _
      $region34: #{tpu_custom_call.1} parent=5 // pred_check_branch
        %169 = sbr.rel (%p166) target = $region36
      $region35: #{tpu_custom_call.1} parent=5 // pred_region
        %s170 = ssub.s32 %s13, 1
        %p171 = pneg %p34
        %p172 = pneg %p31
        %p173 = scmp.lt.s32.totalorder %s18, 1
        %s174 = scalar_select %p173, %s18, 1
        %s175 = smul.addr %s174, 10
        %s176 = smul.addr %s175, 8
        %s177 = scalar_lea.vmem %s1, %s176
        %p178 = pneg %p60
        %p179 = pneg %p57
        %p180 = pneg %p81
        %p181 = pneg %p78
        %p182 = pneg %p102
        %p183 = pneg %p99
        %p184 = pneg %p128
        %p185 = pneg %p125
        %s186 = sand.u32 %s115, 1
        %s187 = scalar_lea.sflag [#allocation3], %s186
        %s188 = sand.u32 %s115, 1
        %s189 = smul.addr %s188, 16
        %s190 = scalar_lea.vmem [#allocation2], %s189
        %p191 = scmp.lt.s32.totalorder %s18, 1
        %s192 = scalar_select %p191, %s18, 1
        %s193 = smul.addr %s192, 10
        %s194 = smul.addr %s193, 8
        %s195 = scalar_lea.vmem %s1, %s194
        %v196 = vld [vmem:[%s0] sm:$0xff]
        %v197 = vld [vmem:[%s0 + $0x8] sm:$0xff]
        %v198 = vld [vmem:[%s0 + $0x10] sm:$0xff]
        %v199 = vld [vmem:[%s0 + $0x18] sm:$0xff]
        %v200 = vadd.f32 %v196, %v198
        %v201 = vadd.f32 %v197, %v199
        %v202 = vmul.f32 %v196, %v196
        %v203 = vmul.f32 %v197, %v197
        %v204 = vmul.f32 %v198, %v198
        %v205 = vmul.f32 %v199, %v199
        %v206 = vadd.f32 %v202, %v204
        %v207 = vadd.f32 %v203, %v205
        %v208 = vadd.f32 %v200, %v201
        %209 = vadd.xlane.f32.xlu0 %v208
        %v210 = vpop.xlane.xlu0 %209
        %v211 = vrcp.pop 512.0
        %v212 = vmul.f32 %v210, %v211
        %v213 = vadd.f32 %v206, %v207
        %214 = vadd.xlane.f32.xlu0 %v213
        %v215 = vpop.xlane.xlu0 %214
        %v216 = vmul.f32 %v215, %v211
        %v217 = vmul.f32 %v212, %v212
        %v218 = vsub.f32 %v216, %v217
        %v219 = vmax.f32 %v218, 0.0
        %v220 = vadd.f32 %v219, 1e-05
        %v221 = vrsqrt.pop %v220
        %v222 = vld [vmem:[%s195] sm:$0xff]
        %v223 = vld [vmem:[%s195 + $0x8] sm:$0xff]
        %v224 = vld [vmem:[%s195 + $0x10] sm:$0xff]
        %v225 = vld [vmem:[%s195 + $0x18] sm:$0xff]
        %v226 = vld [vmem:[%s195 + $0x20] sm:$0xff]
        %v227 = vld [vmem:[%s195 + $0x28] sm:$0xff]
        %v228 = vld [vmem:[%s195 + $0x30] sm:$0xff]
        %v229 = vld [vmem:[%s195 + $0x38] sm:$0xff]
        %v230 = vld [vmem:[%s195 + $0x40] sm:$0xf]
        %v231 = vld [vmem:[%s195 + $0x48] sm:$0xf]
        %v232 = vld [vmem:[%s2] sm:$0xff]
        %v233 = vld [vmem:[%s2 + $0x8] sm:$0xff]
        %v234 = vld [vmem:[%s3] sm:$0xff]
        %v235 = vld [vmem:[%s3 + $0x8] sm:$0xff]
        %237 = vset.pattern.permute.xlu0 0
        %238 = vperm.xlu0 %237, %v234
        %v239 = vpop.permute.xlu0 %238
        %242 = vset.pattern.permute.xlu0 0
        %243 = vperm.xlu0 %242, %v235
        %v244 = vpop.permute.xlu0 %243
        %vm246 = vcmask 293888
        %v248 = vsel %vm246, %v232, 0
        %v251 = vsel %vm246, %v233, 0
        %vm253 = vcmask 1043456
        %v255 = vsel %vm253, %v230, 0
        %v258 = vsel %vm253, %v231, 0
        %260 = vmatprep.subr.mxu0 0.0
        %261 = vmatpush1.msra.mxu0 0.0
        %262 = vmatprep.subr.mxu0 0.0
        %263 = vmatpush1.msra.mxu0 0.0
        %264 = vmatprep.subr.mxu0 0.0
        %265 = vmatpush1.msra.mxu0 0.0
        %266 = vmatprep.subr.mxu0 0.0
        %267 = vmatpush1.msra.mxu0 0.0
        %268 = vmatprep.subr.mxu0 0.0
        %269 = vmatpush1.msra.mxu0 0.0
        %270 = vmatprep.subr.mxu0 0.0
        %271 = vmatpush1.msra.mxu0 0.0
        %272 = vmatprep.subr.mxu0 0.0
        %273 = vmatpush1.msra.mxu0 0.0
        %274 = vmatprep.subr.mxu0 0.0
        %275 = vmatpush1.msra.mxu0 0.0
        %276 = vmatprep.subr.mxu0 0.0
        %277 = vmatpush1.msra.mxu0 0.0
        %278 = vmatprep.subr.mxu0 0.0
        %279 = vmatpush1.msra.mxu0 0.0
        %280 = vmatprep.subr.mxu0 0.0
        %281 = vmatpush1.msra.mxu0 0.0
        %282 = vmatprep.subr.mxu0 %v258
        %283 = vmatpush1.msra.mxu0 %v255
        %284 = vmatprep.subr.mxu0 %v229
        %285 = vmatpush1.msra.mxu0 %v228
        %286 = vmatprep.subr.mxu0 %v227
        %287 = vmatpush1.msra.mxu0 %v226
        %288 = vmatprep.subr.mxu0 %v225
        %289 = vmatpush1.msra.mxu0 %v224
        %290 = vmatprep.subr.mxu0 %v223
        %291 = vmatpush1.msra.mxu0 %v222
        %292 = vmatprep.subr.mxu0 0.0
        %293 = vmatpush2.msra.mxu0 0.0
        %294 = vmatprep.subr.mxu0 0.0
        %295 = vmatpush2.msra.mxu0 0.0
        %296 = vmatprep.subr.mxu0 0.0
        %297 = vmatpush2.msra.mxu0 0.0
        %298 = vmatprep.subr.mxu0 0.0
        %299 = vmatpush2.msra.mxu0 0.0
        %300 = vmatprep.subr.mxu0 0.0
        %301 = vmatpush2.msra.mxu0 0.0
        %302 = vmatprep.subr.mxu0 0.0
        %303 = vmatpush2.msra.mxu0 0.0
        %304 = vmatprep.subr.mxu0 0.0
        %305 = vmatpush2.msra.mxu0 0.0
        %306 = vmatprep.subr.mxu0 0.0
        %307 = vmatpush2.msra.mxu0 0.0
        %308 = vmatprep.subr.mxu0 0.0
        %309 = vmatpush2.msra.mxu0 0.0
        %310 = vmatprep.subr.mxu0 0.0
        %311 = vmatpush2.msra.mxu0 0.0
        %312 = vmatprep.subr.mxu0 0.0
        %313 = vmatpush2.msra.mxu0 0.0
        %314 = vmatprep.subr.mxu0 0.0
        %315 = vmatpush2.msra.mxu0 0.0
        %316 = vmatprep.subr.mxu0 0.0
        %317 = vmatpush2.msra.mxu0 0.0
        %318 = vmatprep.subr.mxu0 0.0
        %319 = vmatpush2.msra.mxu0 0.0
        %320 = vmatprep.subr.mxu0 0.0
        %321 = vmatpush2.msra.mxu0 0.0
        %322 = vmatprep.subr.mxu0 0.0
        %323 = vmatpush2.msra.mxu0 0.0
        %324 = vmatprep.mubr.f32.mxu0 0.0
        %325 = vmatmul.mubr.f32.gmra.mxu0 %v248
        %v326 = vpop.f32.mrf.mxu0
        %v327 = vadd.f32 %v239, %v326
        %v328 = vpop.f32.mrf.mxu0
        %v329 = vadd.f32 %v239, %v328
        %330 = vmatprep.mubr.f32.mxu0 0.0
        %331 = vmatmul.mubr.f32.gmra.mxu0 %v251
        %v332 = vpop.f32.mrf.mxu0
        %v333 = vadd.f32 %v244, %v332
        %v334 = vpop.f32.mrf.mxu0
        %v335 = vadd.f32 %v244, %v334
        %336 = vdwg.mxu0
        %s337 = smul.u32 %s18, 2
        %s338 = smul.addr %s337, 8
        %s339 = scalar_lea.vmem %s0, %s338
        %v340 = vld [vmem:[%s339] sm:$0xff]
        %v341 = vld [vmem:[%s339 + $0x8] sm:$0xff]
        %v342 = vsub.f32 %v340, %v212
        %v343 = vsub.f32 %v341, %v212
        %v344 = vmul.f32 %v342, %v221
        %v345 = vmul.f32 %v343, %v221
        %v346 = vmul.f32 %v327, %v344
        %v347 = vmul.f32 %v329, %v345
        %v348 = vadd.f32 %v346, %v333
        %v349 = vadd.f32 %v347, %v335
        %350 = vst [vmem:[%s190] sm:$0xff] %v348
        %351 = vst [vmem:[%s190 + $0x8] sm:$0xff] %v349
        %s352 = sand.u32 %s115, 1
        %s353 = scalar_lea.sflag [#allocation3], %s352
        %s354 = sand.u32 %s115, 1
        %s355 = smul.addr %s354, 16
        %s356 = scalar_lea.vmem [#allocation2], %s355
        // Predicated region
        $region37: #{tpu_custom_call.1} parent=35 // pred_check
          %p357 = pneg %p125
        $region38: #{tpu_custom_call.1} parent=35 // pred_check_branch
          %359 = sbr.rel (%p357) target = $region40
        $region39: #{tpu_custom_call.1} parent=35 // pred_region
          %s361 = ssub.s32 256, 256
          %362 = vsyncadd %s353, %s361
          %s363 = smul.addr %s18, 2
          %s364 = smul.addr %s363, 128
          %s365 = scalar_lea.hbm %s4, %s364
          %s367 = sshll.u32 %s356, 4
          %s368 = int_to_ptr.vmem [resolvable:$true] %s367
          %370 = dma.vmem_to_hbm [thread:$0]  %s368, 256, %s365, %s353
        $region40: #{tpu_custom_call.1} parent=35 // pred_fallthru
          _
      $region36: #{tpu_custom_call.1} parent=5 // pred_fallthru
        _
      %p371 = scmp.le.s32.totalorder 2, %s13
      // Predicated region
      $region41: #{tpu_custom_call.1} parent=5 // pred_check
        %p372 = pneg %p371
      $region42: #{tpu_custom_call.1} parent=5 // pred_check_branch
        %374 = sbr.rel (%p372) target = $region44
      $region43: #{tpu_custom_call.1} parent=5 // pred_region
        %s375 = ssub.s32 %s13, 2
        // Predicated region
        $region45: #{tpu_custom_call.1} parent=43 // pred_check
          %p376 = pneg %p131
        $region46: #{tpu_custom_call.1} parent=43 // pred_check_branch
          %378 = sbr.rel (%p376) target = $region48
        $region47: #{tpu_custom_call.1} parent=43 // pred_region
          %s379 = sand.u32 %s116, 1
          %s380 = scalar_lea.sflag [#allocation3], %s379
          %s381 = sand.u32 %s116, 1
          %s382 = smul.addr %s381, 16
          %s383 = scalar_lea.vmem [#allocation2], %s382
          %384 = dma.done %s380, 256
        $region48: #{tpu_custom_call.1} parent=43 // pred_fallthru
          _
      $region44: #{tpu_custom_call.1} parent=5 // pred_fallthru
        _
    $region6: #{tpu_custom_call.1} parent=1 // loop_footer
      %s17 = sadd.s32 1, %s13
    $region7: #{tpu_custom_call.1} parent=1 // loop_footer_branch
      %12 = sbr.rel target = $region3
    $region8: #{tpu_custom_call.1} parent=1 // loop_exit
      _
    %385 = vsyncpa [#allocation3], 1
    %s386 = scalar_lea.sflag [#allocation3], 1
    %387 = vsyncpa %s386, 1

</llo_original>
